<compile_context>
chip_gen: v7x
topology: tpu7x:2x2x1
jax: 0.10.0
libtpu: 0.0.40
codegen_flags: <defaults>
</compile_context>

<pallas_src>
import jax
import jax.numpy as jnp
from jax.experimental import pallas as pl
from jax.experimental.pallas import tpu as pltpu


def _gmaxpool_kernel(x_ref, o_ref):
    # x_ref: (4, TC, TW) VMEM tile in the input's native dtype
    # o_ref: (TC, TW) float32 VMEM tile
    x = x_ref[...]
    m = jnp.maximum(jnp.maximum(x[0], x[1]), jnp.maximum(x[2], x[3]))
    o_ref[...] = m.astype(jnp.float32)


def _pick_tile(dim, unit, max_tile):
    """Largest divisor of `dim` that is a multiple of `unit` and <= max_tile.
    Falls back to the full extent (always a legal block size) when none exists."""
    if dim % unit != 0:
        return dim
    best = unit
    t = unit
    while t <= min(dim, max_tile):
        if dim % t == 0:
            best = t
        t += unit
    return best


def gmaxpool2d_p4(x):
    """Pallas implementation of GMaxPool2d(group='p4').forward for NCHW input."""
    B, C, H, W = x.shape
    assert C % 4 == 0, "p4 group pooling requires channels divisible by 4"
    C4 = C // 4
    HW = H * W

    # Free (contiguous) reshape: channel index c = k*C4 + i maps to [k][i].
    xg = x.reshape(B, 4, C4, HW)

    itemsize = jnp.dtype(x.dtype).itemsize
    # Lane tile: large lane-dense multiple of 128; full extent if HW isn't a
    # multiple of 128 (correct, just with some lane padding on the last tile).
    TW = _pick_tile(HW, 128, 2048)
    # Sublane (channel) tile: multiple of 8, sized so one input block (4*TC*TW)
    # stays around <= 2 MiB (x2 double-buffering stays well under scoped VMEM).
    max_tc = max(8, (2 * 1024 * 1024) // (4 * TW * itemsize))
    TC = _pick_tile(C4, 8, max_tc)

    grid = (B, C4 // TC, HW // TW)

    out_flat = pl.pallas_call(
        _gmaxpool_kernel,
        out_shape=jax.ShapeDtypeStruct((B, C4, HW), jnp.float32),
        grid=grid,
        in_specs=[
            # (squeezed batch, full group axis of 4, TC channels, TW spatial lanes)
            pl.BlockSpec((None, 4, TC, TW), lambda b, c, w: (b, 0, c, w)),
        ],
        out_specs=pl.BlockSpec((None, TC, TW), lambda b, c, w: (b, c, w)),
        compiler_params=pltpu.CompilerParams(
            dimension_semantics=("parallel", "parallel", "parallel"),
        ),
    )(xg)

    # Back to NCHW (free reshape).
    return out_flat.reshape(B, C4, H, W)


if __name__ == "__main__":
    key = jax.random.PRNGKey(0)
    # B == C//4 so the reference module's literal channel indexing coincides with
    # the intended p4 group max implemented here.
    B, C, H, W = 2, 8, 16, 16
    x = jax.random.normal(key, (B, C, H, W), dtype=jnp.float32)

    out = gmaxpool2d_p4(x)
    out = jax.block_until_ready(out)

    # pure-JAX reference of the same semantics
    ref = jnp.max(x.reshape(B, 4, C // 4, H, W), axis=1)
    assert out.shape == (B, C // 4, H, W)
    assert out.dtype == jnp.float32
    assert jnp.allclose(out, ref), "mismatch vs reference"

    print("KERNEL_OK")
</pallas_src>

<mosaic_0001>
module attributes {stable_mosaic.version = 11 : i64} {
  func.func @_gmaxpool_kernel(%arg0: i32, %arg1: i32, %arg2: i32, %arg3: memref<1x4x2x256xf32, #tpu.memory_space<vmem>>, %arg4: memref<1x2x256xf32, #tpu.memory_space<vmem>>) attributes {dimension_semantics = [#tpu.dimension_semantics<parallel>, #tpu.dimension_semantics<parallel>, #tpu.dimension_semantics<parallel>], iteration_bounds = array<i64: 2, 1, 1>, scalar_prefetch = 0 : i64, scratch_operands = 0 : i64, tpu.core_type = #tpu.core_type<tc>, window_params = [{transform_indices = @transform_0, window_bounds = array<i64: 1, 4, 2, 256>}, {transform_indices = @transform_1, window_bounds = array<i64: 1, 2, 256>}]} {
    %c0 = arith.constant 0 : index
    %c0_0 = arith.constant 0 : index
    %c0_1 = arith.constant 0 : index
    %c0_2 = arith.constant 0 : index
    %0 = vector.load %arg3[%c0, %c0_0, %c0_1, %c0_2] : memref<1x4x2x256xf32, #tpu.memory_space<vmem>>, vector<1x4x2x256xf32>
    %1 = vector.shape_cast %0 : vector<1x4x2x256xf32> to vector<4x2x256xf32>
    %2 = vector.extract_strided_slice %1 {offsets = [0, 0, 0], sizes = [1, 2, 256], strides = [1, 1, 1]} : vector<4x2x256xf32> to vector<1x2x256xf32>
    %3 = vector.shape_cast %2 : vector<1x2x256xf32> to vector<2x256xf32>
    %4 = vector.extract_strided_slice %1 {offsets = [1, 0, 0], sizes = [1, 2, 256], strides = [1, 1, 1]} : vector<4x2x256xf32> to vector<1x2x256xf32>
    %5 = vector.shape_cast %4 : vector<1x2x256xf32> to vector<2x256xf32>
    %6 = arith.maximumf %3, %5 : vector<2x256xf32>
    %7 = vector.extract_strided_slice %1 {offsets = [2, 0, 0], sizes = [1, 2, 256], strides = [1, 1, 1]} : vector<4x2x256xf32> to vector<1x2x256xf32>
    %8 = vector.shape_cast %7 : vector<1x2x256xf32> to vector<2x256xf32>
    %9 = vector.extract_strided_slice %1 {offsets = [3, 0, 0], sizes = [1, 2, 256], strides = [1, 1, 1]} : vector<4x2x256xf32> to vector<1x2x256xf32>
    %10 = vector.shape_cast %9 : vector<1x2x256xf32> to vector<2x256xf32>
    %11 = arith.maximumf %8, %10 : vector<2x256xf32>
    %12 = arith.maximumf %6, %11 : vector<2x256xf32>
    %c0_3 = arith.constant 0 : index
    %c0_4 = arith.constant 0 : index
    %c0_5 = arith.constant 0 : index
    %13 = vector.load %arg4[%c0_3, %c0_4, %c0_5] : memref<1x2x256xf32, #tpu.memory_space<vmem>>, vector<1x2x256xf32>
    %14 = vector.shape_cast %13 : vector<1x2x256xf32> to vector<2x256xf32>
    %15 = vector.shape_cast %12 : vector<2x256xf32> to vector<1x2x256xf32>
    tpu.vector_store %arg4[%c0_3, %c0_4, %c0_5], %15 {strides = array<i32>} : memref<1x2x256xf32, #tpu.memory_space<vmem>>, vector<1x2x256xf32>,
    return
  }
  func.func @transform_0(%arg0: i32, %arg1: i32, %arg2: i32) -> (i32, i32, i32, i32) {
    %c0_i32 = arith.constant 0 : i32
    %c0_i32_0 = arith.constant 0 : i32
    return %arg0, %c0_i32, %arg1, %arg2 : i32, i32, i32, i32
  }
  func.func @transform_1(%arg0: i32, %arg1: i32, %arg2: i32) -> (i32, i32, i32) {
    %c0_i32 = arith.constant 0 : i32
    return %arg0, %arg1, %arg2 : i32, i32, i32
  }
}

</mosaic_0001>

<llo_original>
// kernel: tpu_custom_call.1
$region0: #{tpu_custom_call.1}
  #allocation0 [shape = 'u32[]', space=smem, size = 0x4, offset = 0x4, fixed_abs, tag = 'smem constant byte address 0x4 - core index']
  #allocation1 [shape = 'u32[144,128]{1,0:T(1,128)}', space=vmem, size = 0x12000, scoped, tag = 'internal scratch']
  %s0 = inlined_call_operand.hbm [shape: f32[2,4,2,256], index: 0, kind: input, shape index: {}]
  %s1 = inlined_call_operand.hbm [shape: f32[2,2,256], index: 1, kind: output, shape index: {}]
  %s2 = sld [smem:[#allocation0]]
  $region41: #{tpu_custom_call.1} parent=0
    _
  %s4 = ssub.s32 1, %s2
  %s5 = scalar_select 0, %s4, %s2
  $region1: #{tpu_custom_call.1} parent=0
    #allocation2 [shape = 'u8[16384]{0}', space=vmem, size = 0x4000, scoped, tag = 'input window, operand 0']
    #allocation3 [shape = 's32[2]{0}', space=sflag, size = 0x8, scoped, tag = 'scoped memory for tpu_custom_call.1']
    #allocation4 [shape = 's32[2]{0}', space=sflag, size = 0x8, scoped, tag = 'scoped memory for tpu_custom_call.1']
    #allocation5 [shape = 'u8[4096]{0}', space=vmem, size = 0x1000, scoped, tag = 'output window, operand 0']
    %6 = vsyncpa [#allocation3], 0
    %s7 = scalar_lea.sflag [#allocation3], 1
    %8 = vsyncpa %s7, 0
    %9 = vsyncpa [#allocation4], 0
    %s10 = scalar_lea.sflag [#allocation4], 1
    %11 = vsyncpa %s10, 0
    loop: start=0, step=1, limit=4
    $region2: #{tpu_custom_call.1} parent=1 // loop_pre_header
      _
    $region3: #{tpu_custom_call.1} parent=1 // loop_header
      %s13 = sphi 0, %s17
      %p14 = scmp.ge.s32.totalorder %s13, 4
      %s20 = sphi 0, %s39
      %s21 = sphi 0, %s35
      %s22 = sphi 0, %s31
      %s23 = sphi 0, %s20
      %s24 = sphi 0, %s21
      %s25 = sphi 0, %s22
      %s26 = sphi 0, %s23
      %s27 = sphi 0, %s24
      %s28 = sphi 0, %s25
      %s46 = sphi 0, %s48
      %s49 = sphi 0, %s46
      %s50 = sphi 0, %s49
      %s66 = sphi 0, %s50
      %s76 = sphi 0, %s78
      %s79 = sphi 0, %s76
      %s80 = sphi 0, %s79
      %s96 = sphi 0, %s80
    $region4: #{tpu_custom_call.1} parent=1 // loop_header_branch
      %16 = sbr.rel (%p14) target = $region8
    $region5: #{tpu_custom_call.1} parent=1 // loop_body
      %s18 = ssub.s32 %s13, 1
      %s19 = ssub.s32 %s13, 2
      %s29 = sadd.s32 1, %s22
      %p30 = scmp.ge.s32.totalorder %s29, 1
      %s31 = scalar_select %p30, 0, %s29
      %s32 = sadd.s32 1, %s21
      %s33 = scalar_select %p30, %s32, %s21
      %p34 = scmp.ge.s32.totalorder %s33, 1
      %s35 = scalar_select %p34, 0, %s33
      %s36 = sadd.s32 1, %s20
      %s37 = scalar_select %p34, %s36, %s20
      %p38 = scmp.ge.s32.totalorder %s37, 2
      %s39 = scalar_select %p38, 0, %s37
      %s40 = ssub.s32 %s20, %s39
      %s41 = ssub.s32 %s21, %s35
      %s42 = sor.u32 %s40, %s41
      %s43 = ssub.s32 %s22, %s31
      %s44 = sor.u32 %s42, %s43
      %p45 = scmp.eq.s32.totalorder %s44, 0
      %s47 = sadd.s32 %s46, 1
      %s48 = scalar_select %p45, %s46, %s47
      %p51 = pneg %p45
      %p52 = scmp.eq.s32.totalorder %s13, 1
      %p53 = por %p51, %p52
      %p54 = scmp.ne.s32.totalorder %s46, %s49
      %p55 = scmp.eq.s32.totalorder %s13, 0
      %p56 = por %p54, %p55
      %p57 = scmp.ne.s32.totalorder %s46, %s49
      %p58 = scmp.eq.s32.totalorder %s18, 1
      %p59 = por %p57, %p58
      %p60 = scmp.ne.s32.totalorder %s49, %s50
      %p61 = scmp.eq.s32.totalorder %s18, 0
      %p62 = por %p60, %p61
      %p63 = scmp.ne.s32.totalorder %s49, %s50
      %p64 = scmp.eq.s32.totalorder %s19, 1
      %p65 = por %p63, %p64
      %p67 = scmp.ne.s32.totalorder %s50, %s66
      %p68 = scmp.eq.s32.totalorder %s19, 0
      %p69 = por %p67, %p68
      %s70 = ssub.s32 %s20, %s39
      %s71 = ssub.s32 %s21, %s35
      %s72 = sor.u32 %s70, %s71
      %s73 = ssub.s32 %s22, %s31
      %s74 = sor.u32 %s72, %s73
      %p75 = scmp.eq.s32.totalorder %s74, 0
      %s77 = sadd.s32 %s76, 1
      %s78 = scalar_select %p75, %s76, %s77
      %p81 = pneg %p75
      %p82 = scmp.eq.s32.totalorder %s13, 1
      %p83 = por %p81, %p82
      %p84 = scmp.ne.s32.totalorder %s76, %s79
      %p85 = scmp.eq.s32.totalorder %s13, 0
      %p86 = por %p84, %p85
      %p87 = scmp.ne.s32.totalorder %s76, %s79
      %p88 = scmp.eq.s32.totalorder %s18, 1
      %p89 = por %p87, %p88
      %p90 = scmp.ne.s32.totalorder %s79, %s80
      %p91 = scmp.eq.s32.totalorder %s18, 0
      %p92 = por %p90, %p91
      %p93 = scmp.ne.s32.totalorder %s79, %s80
      %p94 = scmp.eq.s32.totalorder %s19, 1
      %p95 = por %p93, %p94
      %p97 = scmp.ne.s32.totalorder %s80, %s96
      %p98 = scmp.eq.s32.totalorder %s19, 0
      %p99 = por %p97, %p98
      %p100 = scmp.le.s32.totalorder 1, %s13
      %p101 = scmp.lt.s32.totalorder %s13, 3
      %p102 = pnand %p100, %p101
      %p103 = pneg %p102
      // Predicated region
      $region9: #{tpu_custom_call.1} parent=5 // pred_check
        _
      $region10: #{tpu_custom_call.1} parent=5 // pred_check_branch
        %105 = sbr.rel (%p102) target = $region12
      $region11: #{tpu_custom_call.1} parent=5 // pred_region
        %s106 = ssub.s32 %s13, 1
      $region12: #{tpu_custom_call.1} parent=5 // pred_fallthru
        _
      %p107 = scmp.lt.s32.totalorder %s13, 2
      // Predicated region
      $region13: #{tpu_custom_call.1} parent=5 // pred_check
        %p108 = pneg %p107
      $region14: #{tpu_custom_call.1} parent=5 // pred_check_branch
        %110 = sbr.rel (%p108) target = $region16
      $region15: #{tpu_custom_call.1} parent=5 // pred_region
        // Predicated region
        $region17: #{tpu_custom_call.1} parent=15 // pred_check
          %p111 = pneg %p56
        $region18: #{tpu_custom_call.1} parent=15 // pred_check_branch
          %113 = sbr.rel (%p111) target = $region20
        $region19: #{tpu_custom_call.1} parent=15 // pred_region
          %s114 = sand.u32 %s46, 1
          %s115 = scalar_lea.sflag [#allocation3], %s114
          %s116 = sand.u32 %s46, 1
          %s117 = smul.addr %s116, 16
          %s118 = scalar_lea.vmem [#allocation2], %s117
          %s119 = smul.u32 2, %s22
          %s121 = ssub.s32 256, 256
          %122 = vsyncadd %s115, %s121
          %s123 = smul.addr %s21, 2
          %s124 = sadd.s32 %s119, %s123
          %s125 = smul.addr %s20, 8
          %s126 = sadd.s32 %s124, %s125
          %s127 = smul.addr %s126, 32
          %s128 = scalar_lea.hbm %s0, %s127
          %s129 = sshll.u32 %s118, 4
          %s130 = int_to_ptr.vmem [resolvable:$true] %s129
          %135 = dma.hbm_to_vmem [thread:$0]  %s128, 256, %s130, %s115, 64, 64, 4
        $region20: #{tpu_custom_call.1} parent=15 // pred_fallthru
          _
      $region16: #{tpu_custom_call.1} parent=5 // pred_fallthru
        _
      %p136 = scmp.le.s32.totalorder 1, %s13
      %p137 = scmp.lt.s32.totalorder %s13, 3
      %p138 = pnand %p136, %p137
      %p139 = pneg %p138
      // Predicated region
      $region21: #{tpu_custom_call.1} parent=5 // pred_check
        _
      $region22: #{tpu_custom_call.1} parent=5 // pred_check_branch
        %141 = sbr.rel (%p138) target = $region24
      $region23: #{tpu_custom_call.1} parent=5 // pred_region
        %s142 = ssub.s32 %s13, 1
        %s143 = sand.u32 %s49, 1
        %s144 = scalar_lea.sflag [#allocation3], %s143
        %s145 = sand.u32 %s49, 1
        %s146 = smul.addr %s145, 16
        %s147 = scalar_lea.vmem [#allocation2], %s146
        // Predicated region
        $region25: #{tpu_custom_call.1} parent=23 // pred_check
          %p148 = pneg %p62
        $region26: #{tpu_custom_call.1} parent=23 // pred_check_branch
          %150 = sbr.rel (%p148) target = $region28
        $region27: #{tpu_custom_call.1} parent=23 // pred_region
          %151 = dma.done %s144, 256
        $region28: #{tpu_custom_call.1} parent=23 // pred_fallthru
          _
        %s152 = sand.u32 %s49, 1
        %s153 = scalar_lea.sflag [#allocation3], %s152
        %s154 = sand.u32 %s49, 1
        %s155 = smul.addr %s154, 16
        %s156 = scalar_lea.vmem [#allocation2], %s155
        %p157 = pneg %p62
        %p158 = pneg %p59
        %p159 = pneg %p92
        %p160 = pneg %p89
        %s161 = sand.u32 %s79, 1
        %s162 = scalar_lea.sflag [#allocation4], %s161
        %s163 = sand.u32 %s79, 1
        %s164 = smul.addr %s163, 4
        %s165 = scalar_lea.vmem [#allocation5], %s164
        %s166 = smul.u32 2, %s25
        %s167 = smul.u32 2, %s25
        %v168 = vld [vmem:[%s147] sm:$0xf]
        %v169 = vld [vmem:[%s147 + $0x4] sm:$0xf]
        %v170 = vld [vmem:[%s147 + $0x8] sm:$0xf]
        %v171 = vld [vmem:[%s147 + $0xc] sm:$0xf]
        %v172 = vmax.f32 %v168, %v169
        %v173 = vmax.f32 %v170, %v171
        %v174 = vmax.f32 %v172, %v173
        %175 = vst [vmem:[%s165] sm:$0xf] %v174
        %s176 = sand.u32 %s79, 1
        %s177 = scalar_lea.sflag [#allocation4], %s176
        %s178 = sand.u32 %s79, 1
        %s179 = smul.addr %s178, 4
        %s180 = scalar_lea.vmem [#allocation5], %s179
        // Predicated region
        $region29: #{tpu_custom_call.1} parent=23 // pred_check
          %p181 = pneg %p89
        $region30: #{tpu_custom_call.1} parent=23 // pred_check_branch
          %183 = sbr.rel (%p181) target = $region32
        $region31: #{tpu_custom_call.1} parent=23 // pred_region
          %s184 = smul.u32 2, %s25
          %s186 = ssub.s32 64, 64
          %187 = vsyncadd %s177, %s186
          %s188 = smul.addr %s24, 2
          %s189 = sadd.s32 %s184, %s188
          %s190 = smul.addr %s23, 2
          %s191 = sadd.s32 %s189, %s190
          %s192 = smul.addr %s191, 32
          %s193 = scalar_lea.hbm %s1, %s192
          %s195 = sshll.u32 %s180, 4
          %s196 = int_to_ptr.vmem [resolvable:$true] %s195
          %198 = dma.vmem_to_hbm [thread:$0]  %s196, 64, %s193, %s177
        $region32: #{tpu_custom_call.1} parent=23 // pred_fallthru
          _
      $region24: #{tpu_custom_call.1} parent=5 // pred_fallthru
        _
      %p199 = scmp.le.s32.totalorder 2, %s13
      // Predicated region
      $region33: #{tpu_custom_call.1} parent=5 // pred_check
        %p200 = pneg %p199
      $region34: #{tpu_custom_call.1} parent=5 // pred_check_branch
        %202 = sbr.rel (%p200) target = $region36
      $region35: #{tpu_custom_call.1} parent=5 // pred_region
        %s203 = ssub.s32 %s13, 2
        // Predicated region
        $region37: #{tpu_custom_call.1} parent=35 // pred_check
          %p204 = pneg %p95
        $region38: #{tpu_custom_call.1} parent=35 // pred_check_branch
          %206 = sbr.rel (%p204) target = $region40
        $region39: #{tpu_custom_call.1} parent=35 // pred_region
          %s207 = sand.u32 %s80, 1
          %s208 = scalar_lea.sflag [#allocation4], %s207
          %s209 = sand.u32 %s80, 1
          %s210 = smul.addr %s209, 4
          %s211 = scalar_lea.vmem [#allocation5], %s210
          %212 = dma.done %s208, 64
        $region40: #{tpu_custom_call.1} parent=35 // pred_fallthru
          _
      $region36: #{tpu_custom_call.1} parent=5 // pred_fallthru
        _
    $region6: #{tpu_custom_call.1} parent=1 // loop_footer
      %s17 = sadd.s32 1, %s13
    $region7: #{tpu_custom_call.1} parent=1 // loop_footer_branch
      %12 = sbr.rel target = $region3
    $region8: #{tpu_custom_call.1} parent=1 // loop_exit
      _
    %213 = vsyncpa [#allocation3], 1
    %s214 = scalar_lea.sflag [#allocation3], 1
    %215 = vsyncpa %s214, 1
    %216 = vsyncpa [#allocation4], 1
    %s217 = scalar_lea.sflag [#allocation4], 1
    %218 = vsyncpa %s217, 1

</llo_original>
